<compile_context>
chip_gen: v5e
topology: v5e:2x2
jax: 0.10.0
libtpu: 0.0.40
codegen_flags: <defaults>
</compile_context>

<pallas_src>
import functools
import math

import jax
import jax.numpy as jnp
from jax.experimental import pallas as pl
from jax.experimental.pallas import tpu as pltpu

_LANES = 128
_SUBLANES = 8
_VMEM_LIMIT_BYTES = 32 * 1024 * 1024  # safe on v5e/v6e (128 MiB) and v7x (64 MiB)


def _copy_kernel(x_ref, o_ref):
    # Pure streaming copy of one lane-dense block.
    o_ref[...] = x_ref[...]


@functools.lru_cache(maxsize=None)
def _build_copy(shape, dtype_name, block_shape):
    """Build a jitted, donation-enabled identity-copy pallas_call for `shape`."""
    rows, cols = shape
    br, bc = block_shape
    grid = (pl.cdiv(rows, br), pl.cdiv(cols, bc))

    call = pl.pallas_call(
        _copy_kernel,
        out_shape=jax.ShapeDtypeStruct(shape, jnp.dtype(dtype_name)),
        grid_spec=pltpu.PrefetchScalarGridSpec(
            num_scalar_prefetch=0,
            grid=grid,
            in_specs=[pl.BlockSpec(block_shape, lambda i, j: (i, j))],
            out_specs=pl.BlockSpec(block_shape, lambda i, j: (i, j)),
        ),
        # Output aliases input: the flattened data is already contiguous in the
        # right order, so no separate output buffer / extra HBM write is needed.
        input_output_aliases={0: 0},
        compiler_params=pltpu.CompilerParams(
            dimension_semantics=("parallel", "parallel"),
            vmem_limit_bytes=_VMEM_LIMIT_BYTES,
        ),
    )
    # Donate the flattened view so the alias actually takes effect (the view is
    # an intermediate created inside flatten_pallas; `x` itself is untouched).
    return jax.jit(call, donate_argnums=0)


def flatten_pallas(x: jax.Array, target_block_bytes: int = 4 * 1024 * 1024) -> jax.Array:
    """Equivalent of PyTorch Flatten: (B, ...) -> (B, prod(...))."""
    B = x.shape[0]
    D = math.prod(x.shape[1:]) if x.ndim > 1 else 1
    total = B * D
    itemsize = jnp.dtype(x.dtype).itemsize

    if total % _LANES == 0:
        # Main path: lane-dense 2D view (rows, 128) of the contiguous buffer,
        # full 8-sublane utilization regardless of B.
        rows, cols = total // _LANES, _LANES
        budget_rows = max(
            _SUBLANES,
            (target_block_bytes // (cols * itemsize)) // _SUBLANES * _SUBLANES,
        )
        block_rows = rows if rows <= budget_rows else budget_rows  # mult of 8 or full dim
        block_shape = (block_rows, cols)
    else:
        # Fallback for odd total sizes: (B, D) view, lane tile bounded by the
        # VMEM budget (never a single whole-array block for huge D).
        rows, cols = B, D
        budget_cols = max(
            _LANES,
            (target_block_bytes // (max(rows, 1) * itemsize)) // _LANES * _LANES,
        )
        block_cols = cols if cols <= budget_cols else budget_cols  # mult of 128 or full dim
        budget_rows = max(
            _SUBLANES,
            (target_block_bytes // (block_cols * itemsize)) // _SUBLANES * _SUBLANES,
        )
        block_rows = rows if rows <= budget_rows else budget_rows
        block_shape = (block_rows, block_cols)

    # Metadata-only reshape (row-major), identical ordering to torch .view(B, -1).
    flat = x.reshape(rows, cols)
    out = _build_copy(flat.shape, str(flat.dtype), block_shape)(flat)
    return out.reshape(B, D)


if __name__ == "__main__":
    key = jax.random.PRNGKey(0)
    B, C, H, W = 2, 4, 16, 16
    x = jax.random.normal(key, (B, C, H, W), dtype=jnp.float32)

    # Reference (== torch .view(B, -1) semantics), computed before the kernel.
    y_ref = x.reshape(B, C * H * W)

    y = flatten_pallas(x)
    y = jax.block_until_ready(y)

    assert y.shape == (B, C * H * W), y.shape
    assert y.dtype == x.dtype
    assert bool(jnp.array_equal(y, y_ref))

    # Also exercise the non-lane-divisible fallback path.
    x2 = jax.random.normal(key, (2, 3, 5, 7), dtype=jnp.float32)
    y2_ref = x2.reshape(2, 3 * 5 * 7)
    y2 = jax.block_until_ready(flatten_pallas(x2))
    assert y2.shape == (2, 105) and bool(jnp.array_equal(y2, y2_ref))

    print("KERNEL_OK")
</pallas_src>

<mosaic_0001>
module attributes {stable_mosaic.version = 11 : i64} {
  func.func @_copy_kernel(%arg0: i32, %arg1: i32, %arg2: memref<16x128xf32, #tpu.memory_space<vmem>>, %arg3: memref<16x128xf32, #tpu.memory_space<vmem>>) attributes {dimension_semantics = [#tpu.dimension_semantics<parallel>, #tpu.dimension_semantics<parallel>], iteration_bounds = array<i64: 1, 1>, scalar_prefetch = 0 : i64, scratch_operands = 0 : i64, tpu.core_type = #tpu.core_type<tc>, window_params = [{transform_indices = @transform_0, window_bounds = array<i64: 16, 128>}, {transform_indices = @transform_1, window_bounds = array<i64: 16, 128>}]} {
    %c0 = arith.constant 0 : index
    %c0_0 = arith.constant 0 : index
    %0 = vector.load %arg2[%c0, %c0_0] : memref<16x128xf32, #tpu.memory_space<vmem>>, vector<16x128xf32>
    %c0_1 = arith.constant 0 : index
    %c0_2 = arith.constant 0 : index
    %1 = vector.load %arg3[%c0_1, %c0_2] : memref<16x128xf32, #tpu.memory_space<vmem>>, vector<16x128xf32>
    tpu.vector_store %arg3[%c0_1, %c0_2], %0 {strides = array<i32>} : memref<16x128xf32, #tpu.memory_space<vmem>>, vector<16x128xf32>,
    return
  }
  func.func @transform_0(%arg0: i32, %arg1: i32) -> (i32, i32) {
    %c0_i32 = arith.constant 0 : i32
    return %arg0, %arg1 : i32, i32
  }
  func.func @transform_1(%arg0: i32, %arg1: i32) -> (i32, i32) {
    %c0_i32 = arith.constant 0 : i32
    return %arg0, %arg1 : i32, i32
  }
}

</mosaic_0001>

<llo_original>
// kernel: tpu_custom_call.1
$region0: #{tpu_custom_call.1}
  #allocation0 [shape = 'u32[]', space=smem, size = 0x4, offset = 0x4, fixed_abs, tag = 'smem constant byte address 0x4 - core index']
  #allocation1 [shape = 'u32[72,128]{1,0:T(1,128)}', space=vmem, size = 0x9000, scoped, tag = 'internal scratch']
  %s0 = inlined_call_operand.hbm [shape: f32[16,128], index: 0, kind: input, shape index: {}, may-alias: {0,1}]
  %s1 = inlined_call_operand.hbm [shape: f32[16,128], index: 1, kind: output, shape index: {}, may-alias: {0,1}]
  %s2 = sld [smem:[#allocation0]]
  $region18: #{tpu_custom_call.1} parent=0
    _
  %s4 = ssub.s32 1, %s2
  %s5 = scalar_select 0, %s4, %s2
  $region1: #{tpu_custom_call.1} parent=0
    #allocation2 [shape = 'u8[8192]{0}', space=vmem, size = 0x2000, scoped, tag = 'input window, operand 0, single buffered']
    #allocation3 [shape = 's32[1]{0}', space=sflag, size = 0x4, scoped, tag = 'scoped memory for tpu_custom_call.1']
    #allocation4 [shape = 's32[1]{0}', space=sflag, size = 0x4, scoped, tag = 'scoped memory for tpu_custom_call.1']
    #allocation5 [shape = 'u8[8192]{0}', space=vmem, size = 0x2000, scoped, tag = 'output window, operand 0, single buffered']
    %6 = vsyncpa [#allocation3], 0
    %7 = vsyncpa [#allocation4], 0
    // Predicated region
    $region2: #{tpu_custom_call.1} parent=1 // pred_check
      _
    $region3: #{tpu_custom_call.1} parent=1 // pred_check_branch
      %9 = sbr.rel (0) target = $region5
    $region4: #{tpu_custom_call.1} parent=1 // pred_region
      %11 = vsyncadd [#allocation3], 0
      %s12 = sshll.u32 %s0, 4
      %s13 = int_to_ptr.hbm [resolvable:$true] %s12
      %s14 = sshll.u32 [#allocation2], 4
      %s15 = int_to_ptr.vmem [resolvable:$true] %s14
      %20 = dma.hbm_to_vmem [thread:$0]  %s13, 256, %s15, [#allocation3], 128, 128, 8
    $region5: #{tpu_custom_call.1} parent=1 // pred_fallthru
      _
    // Predicated region
    $region6: #{tpu_custom_call.1} parent=1 // pred_check
      _
    $region7: #{tpu_custom_call.1} parent=1 // pred_check_branch
      %22 = sbr.rel (0) target = $region9
    $region8: #{tpu_custom_call.1} parent=1 // pred_region
      %24 = dma.done [#allocation3], 256
    $region9: #{tpu_custom_call.1} parent=1 // pred_fallthru
      _
    %v25 = vld [vmem:[#allocation2] sm:$0xff]
    %v26 = vld [vmem:[#allocation2 + $0x8] sm:$0xff]
    %27 = vst [vmem:[#allocation5] sm:$0xff] %v25
    %28 = vst [vmem:[#allocation5 + $0x8] sm:$0xff] %v26
    // Predicated region
    $region10: #{tpu_custom_call.1} parent=1 // pred_check
      _
    $region11: #{tpu_custom_call.1} parent=1 // pred_check_branch
      %30 = sbr.rel (0) target = $region13
    $region12: #{tpu_custom_call.1} parent=1 // pred_region
      %32 = vsyncadd [#allocation4], 0
      %s33 = sshll.u32 [#allocation5], 4
      %s34 = int_to_ptr.vmem [resolvable:$true] %s33
      %s35 = sshll.u32 %s1, 4
      %s36 = int_to_ptr.hbm [resolvable:$true] %s35
      %41 = dma.vmem_to_hbm [thread:$0]  %s34, 256, %s36, [#allocation4], 128, 128, 8
    $region13: #{tpu_custom_call.1} parent=1 // pred_fallthru
      _
    // Predicated region
    $region14: #{tpu_custom_call.1} parent=1 // pred_check
      _
    $region15: #{tpu_custom_call.1} parent=1 // pred_check_branch
      %43 = sbr.rel (0) target = $region17
    $region16: #{tpu_custom_call.1} parent=1 // pred_region
      %45 = dma.done [#allocation4], 256
    $region17: #{tpu_custom_call.1} parent=1 // pred_fallthru
      _
    %46 = vsyncpa [#allocation3], 1
    %47 = vsyncpa [#allocation4], 1

</llo_original>
